<compile_context>
chip_gen: v7x
topology: tpu7x:2x2x1
jax: 0.10.0
libtpu: 0.0.40
codegen_flags: <defaults>
</compile_context>

<pallas_src>
import functools

import jax
import jax.numpy as jnp
from jax.experimental import pallas as pl
from jax.experimental.pallas import tpu as pltpu


_TARGET_TILE_BYTES = 8 * 1024 * 1024  # per-grid-step logits streaming target


def _round_up(x, m):
    return ((x + m - 1) // m) * m


def _arcface_sum_others_kernel(logits_ref, labels_ref, out_ref, acc_ref, *,
                               scale, num_classes, needs_col_mask):
    c = pl.program_id(1)
    nc = pl.num_programs(1)

    @pl.when(c == 0)
    def _init():
        acc_ref[...] = jnp.zeros_like(acc_ref)

    logits = logits_ref[...].astype(jnp.float32)          # (TB, TC) f32
    tb, tc = logits.shape
    labels = labels_ref[...]                              # (TB, 1) int32

    # Lane-relative class index compared against a per-row relative label
    # (moves the per-element "+ c*tc" add to a (TB,1) subtract).
    iota_c = jax.lax.broadcasted_iota(jnp.int32, (tb, tc), 1)
    rel_label = labels - c * tc                           # (TB, 1)
    keep = iota_c != rel_label                            # exclude target in-loop
    if needs_col_mask:
        # Tail C tile: mask lanes past the true class count (padded DMA garbage).
        keep = jnp.logical_and(keep, iota_c < (num_classes - c * tc))

    scaled = jnp.minimum(logits * scale, 80.0)
    e = jnp.where(keep, jnp.exp(scaled), 0.0)

    # Lane-dense per-row partial sums: plain VPU adds over static lane-aligned
    # slices; the single cross-lane XLU reduction is deferred to finalize.
    al = acc_ref.shape[1]
    part = e[:, 0:al]
    for g in range(1, tc // al):
        part = part + e[:, g * al:(g + 1) * al]
    acc_ref[...] += part

    @pl.when(c == nc - 1)
    def _finalize():
        out_ref[...] = jnp.sum(acc_ref[...], axis=1, keepdims=True)


def arcface_loss(logits, labels, scale=30.0, margin=0.5, eps=1e-7,
                 block_b=None, block_c=None):
    """ArcFace loss.  logits: [B, C] cosine similarities (f32/bf16),
    labels: [B] int.  Returns scalar loss in logits.dtype."""
    out_dtype = logits.dtype
    B, C = logits.shape
    labels = labels.astype(jnp.int32)
    itemsize = jnp.dtype(logits.dtype).itemsize

    # ---- tile selection -----------------------------------------------------
    if block_c is None:
        block_c = C if C < 128 else min(_round_up(C, 128), 8192)
    if block_b is None:
        if B <= 8:
            block_b = B
        else:
            # ~8 MiB of logits streamed per grid step ...
            target_rows = max(8, (_TARGET_TILE_BYTES // itemsize) // block_c)
            # ... but keep >= 2 B tiles so the "parallel" axis can shard across
            # both v7x TensorCores.
            two_tile_cap = _round_up(max((B + 1) // 2, 8), 8)
            block_b = max(8, min(_round_up(target_rows, 8), two_tile_cap, 512,
                                 _round_up(B, 8)))
    assert (block_b % 8 == 0) or (block_b == B)
    assert (block_c % 128 == 0) or (block_c == C)

    grid = (pl.cdiv(B, block_b), pl.cdiv(C, block_c))
    acc_lanes = 128 if block_c >= 128 else block_c
    needs_col_mask = (C % block_c) != 0

    # VMEM budget from the actual footprint (double-buffered logits/labels/out
    # plus the accumulator scratch), with headroom; stays within v7x's 64 MiB.
    vmem_bytes = (2 * block_b * block_c * itemsize       # logits (double-buffered)
                  + 2 * block_b * 4                       # labels
                  + 2 * block_b * 4                       # output rows
                  + block_b * acc_lanes * 4)              # accumulator scratch
    vmem_limit = min(max(int(vmem_bytes * 1.25) + (1 << 20), 4 << 20), 48 << 20)

    kernel = functools.partial(
        _arcface_sum_others_kernel,
        scale=float(scale), num_classes=C, needs_col_mask=needs_col_mask)

    sum_others = pl.pallas_call(
        kernel,
        out_shape=jax.ShapeDtypeStruct((B, 1), jnp.float32),
        grid_spec=pltpu.PrefetchScalarGridSpec(
            num_scalar_prefetch=0,
            grid=grid,
            in_specs=[
                pl.BlockSpec((block_b, block_c), lambda b, c: (b, c)),
                pl.BlockSpec((block_b, 1), lambda b, c: (b, 0)),
            ],
            out_specs=pl.BlockSpec((block_b, 1), lambda b, c: (b, 0)),
            scratch_shapes=[
                pltpu.VMEM((block_b, acc_lanes), jnp.float32),
            ],
        ),
        compiler_params=pltpu.CompilerParams(
            dimension_semantics=("parallel", "arbitrary"),
            vmem_limit_bytes=vmem_limit,
        ),
    )(logits, labels.reshape(B, 1))

    # ---- O(B) epilogue in plain JAX ----------------------------------------
    cos_t = jnp.take_along_axis(logits, labels[:, None], axis=1)[:, 0]
    cos_t = jnp.clip(cos_t.astype(jnp.float32), -1.0 + eps, 1.0 - eps)
    theta = jnp.arccos(cos_t)
    numerator = scale * jnp.cos(theta + margin)
    denominator = jnp.exp(jnp.minimum(numerator, 80.0)) + sum_others[:, 0]
    L = numerator - jnp.log(denominator)
    return (-jnp.mean(L)).astype(out_dtype)


def _arcface_reference(logits, labels, scale=30.0, margin=0.5, eps=1e-7):
    """Pure-JAX mirror of the PyTorch forward, for verification."""
    B, C = logits.shape
    lf = logits.astype(jnp.float32)
    cos_t = lf[jnp.arange(B), labels]
    theta = jnp.arccos(jnp.clip(cos_t, -1.0 + eps, 1.0 - eps))
    numerator = scale * jnp.cos(theta + margin)
    onehot = jax.nn.one_hot(labels, C, dtype=jnp.bool_)
    max_logit = jnp.minimum(scale * lf, 80.0)
    sum_others = jnp.sum(jnp.where(onehot, 0.0, jnp.exp(max_logit)), axis=1)
    denom = jnp.exp(jnp.minimum(numerator, 80.0)) + sum_others
    L = numerator - jnp.log(denom)
    return (-jnp.mean(L)).astype(logits.dtype)


if __name__ == "__main__":
    key = jax.random.PRNGKey(0)
    k1, k2, k3, k4, k5, k6 = jax.random.split(key, 6)

    # case 1: tiny single-tile shapes (default auto tiles, C < 128 path)
    B1, C1 = 8, 16
    logits1 = jax.random.uniform(k1, (B1, C1), dtype=jnp.float32, minval=-1.0, maxval=1.0)
    labels1 = jax.random.randint(k2, (B1,), 0, C1, dtype=jnp.int32)
    loss1 = jax.block_until_ready(arcface_loss(logits1, labels1))
    ref1 = jax.block_until_ready(_arcface_reference(logits1, labels1))
    assert jnp.allclose(loss1, ref1, atol=1e-4, rtol=1e-4), (loss1, ref1)

    # case 2: non-aligned shapes exercising a real (parallel B x reduction C)
    # grid with partial tail tiles on both axes (no wrapper-side padding).
    B2, C2 = 12, 300
    logits2 = jax.random.uniform(k3, (B2, C2), dtype=jnp.float32, minval=-1.0, maxval=1.0)
    labels2 = jax.random.randint(k4, (B2,), 0, C2, dtype=jnp.int32)
    loss2 = jax.block_until_ready(arcface_loss(logits2, labels2, block_b=8, block_c=128))
    ref2 = jax.block_until_ready(_arcface_reference(logits2, labels2))
    assert jnp.allclose(loss2, ref2, atol=1e-4, rtol=1e-4), (loss2, ref2)

    # case 3: peaked (trained-model-like) distribution where the target cosine
    # dominates -- exercises the in-loop target exclusion (no cancellation).
    B3, C3 = 16, 256
    logits3 = jax.random.uniform(k5, (B3, C3), dtype=jnp.float32, minval=-0.3, maxval=0.5)
    labels3 = jax.random.randint(k6, (B3,), 0, C3, dtype=jnp.int32)
    logits3 = logits3.at[jnp.arange(B3), labels3].set(0.999)
    loss3 = jax.block_until_ready(arcface_loss(logits3, labels3))
    ref3 = jax.block_until_ready(_arcface_reference(logits3, labels3))
    assert jnp.allclose(loss3, ref3, atol=1e-4, rtol=1e-4), (loss3, ref3)

    print("KERNEL_OK")
</pallas_src>

<mosaic_0001>
module attributes {stable_mosaic.version = 11 : i64} {
  func.func @_arcface_sum_others_kernel(%arg0: i32, %arg1: i32, %arg2: memref<8x16xf32, #tpu.memory_space<vmem>>, %arg3: memref<8x1xi32, #tpu.memory_space<vmem>>, %arg4: memref<8x1xf32, #tpu.memory_space<vmem>>, %arg5: memref<8x16xf32, #tpu.memory_space<vmem>>) attributes {dimension_semantics = [#tpu.dimension_semantics<parallel>, #tpu.dimension_semantics<arbitrary>], iteration_bounds = array<i64: 1, 1>, scalar_prefetch = 0 : i64, scratch_operands = 1 : i64, tpu.core_type = #tpu.core_type<tc>, window_params = [{transform_indices = @transform_0, window_bounds = array<i64: 8, 16>}, {transform_indices = @transform_1, window_bounds = array<i64: 8, 1>}, {transform_indices = @transform_2, window_bounds = array<i64: 8, 1>}]} {
    %c0_i32 = arith.constant 0 : i32
    %0 = arith.cmpi eq, %arg1, %c0_i32 : i32
    %1 = arith.extui %0 : i1 to i32
    %c0_i32_0 = arith.constant 0 : i32
    %2 = arith.cmpi ne, %1, %c0_i32_0 : i32
    scf.if %2 {
      %cst_12 = arith.constant 0.000000e+00 : f32
      %24 = vector.broadcast %cst_12 : f32 to vector<8x16xf32>
      %c0_13 = arith.constant 0 : index
      %c0_14 = arith.constant 0 : index
      %25 = vector.load %arg5[%c0_13, %c0_14] : memref<8x16xf32, #tpu.memory_space<vmem>>, vector<8x16xf32>
      tpu.vector_store %arg5[%c0_13, %c0_14], %24 {strides = array<i32>} : memref<8x16xf32, #tpu.memory_space<vmem>>, vector<8x16xf32>,
    } else {
    }
    %c0 = arith.constant 0 : index
    %c0_1 = arith.constant 0 : index
    %3 = vector.load %arg2[%c0, %c0_1] : memref<8x16xf32, #tpu.memory_space<vmem>>, vector<8x16xf32>
    %c0_2 = arith.constant 0 : index
    %c0_3 = arith.constant 0 : index
    %4 = vector.load %arg3[%c0_2, %c0_3] : memref<8x1xi32, #tpu.memory_space<vmem>>, vector<8x1xi32>
    %5 = tpu.iota {dimensions = array<i32: 1>} : vector<8x16xi32>
    %c16_i32 = arith.constant 16 : i32
    %6 = arith.muli %arg1, %c16_i32 : i32
    %7 = vector.broadcast %6 : i32 to vector<8x1xi32>
    %8 = arith.subi %4, %7 : vector<8x1xi32>
    %9 = vector.broadcast %8 : vector<8x1xi32> to vector<8x16xi32>
    %10 = arith.cmpi ne, %5, %9 : vector<8x16xi32>
    %cst = arith.constant 3.000000e+01 : f32
    %11 = vector.broadcast %cst : f32 to vector<8x16xf32>
    %12 = arith.mulf %3, %11 : vector<8x16xf32>
    %cst_4 = arith.constant 8.000000e+01 : f32
    %13 = vector.broadcast %cst_4 : f32 to vector<8x16xf32>
    %14 = arith.minimumf %12, %13 : vector<8x16xf32>
    %15 = math.exp %14 : vector<8x16xf32>
    %cst_5 = arith.constant 0.000000e+00 : f32
    %16 = vector.broadcast %cst_5 : f32 to vector<8x16xf32>
    %17 = arith.select %10, %15, %16 : vector<8x16xi1>, vector<8x16xf32>
    %c0_6 = arith.constant 0 : index
    %c0_7 = arith.constant 0 : index
    %18 = vector.load %arg5[%c0_6, %c0_7] : memref<8x16xf32, #tpu.memory_space<vmem>>, vector<8x16xf32>
    %19 = arith.addf %18, %17 : vector<8x16xf32>
    %c0_8 = arith.constant 0 : index
    %c0_9 = arith.constant 0 : index
    %20 = vector.load %arg5[%c0_8, %c0_9] : memref<8x16xf32, #tpu.memory_space<vmem>>, vector<8x16xf32>
    tpu.vector_store %arg5[%c0_8, %c0_9], %19 {strides = array<i32>} : memref<8x16xf32, #tpu.memory_space<vmem>>, vector<8x16xf32>,
    %c0_i32_10 = arith.constant 0 : i32
    %21 = arith.cmpi eq, %arg1, %c0_i32_10 : i32
    %22 = arith.extui %21 : i1 to i32
    %c0_i32_11 = arith.constant 0 : i32
    %23 = arith.cmpi ne, %22, %c0_i32_11 : i32
    scf.if %23 {
      %c0_12 = arith.constant 0 : index
      %c0_13 = arith.constant 0 : index
      %24 = vector.load %arg5[%c0_12, %c0_13] : memref<8x16xf32, #tpu.memory_space<vmem>>, vector<8x16xf32>
      %cst_14 = arith.constant dense<0.000000e+00> : vector<8xf32>
      %25 = vector.multi_reduction <add>, %24, %cst_14 [1] : vector<8x16xf32> to vector<8xf32>
      %26 = vector.shape_cast %25 : vector<8xf32> to vector<8x1xf32>
      %c0_15 = arith.constant 0 : index
      %c0_16 = arith.constant 0 : index
      %27 = vector.load %arg4[%c0_15, %c0_16] : memref<8x1xf32, #tpu.memory_space<vmem>>, vector<8x1xf32>
      tpu.vector_store %arg4[%c0_15, %c0_16], %26 {strides = array<i32>} : memref<8x1xf32, #tpu.memory_space<vmem>>, vector<8x1xf32>,
    } else {
    }
    return
  }
  func.func @transform_0(%arg0: i32, %arg1: i32) -> (i32, i32) {
    %c0_i32 = arith.constant 0 : i32
    return %arg0, %arg1 : i32, i32
  }
  func.func @transform_1(%arg0: i32, %arg1: i32) -> (i32, i32) {
    %c0_i32 = arith.constant 0 : i32
    %c0_i32_0 = arith.constant 0 : i32
    return %arg0, %c0_i32 : i32, i32
  }
  func.func @transform_2(%arg0: i32, %arg1: i32) -> (i32, i32) {
    %c0_i32 = arith.constant 0 : i32
    %c0_i32_0 = arith.constant 0 : i32
    return %arg0, %c0_i32 : i32, i32
  }
}

</mosaic_0001>

<llo_original>
// kernel: tpu_custom_call.1
$region0: #{tpu_custom_call.1}
  #allocation0 [shape = 'u32[]', space=smem, size = 0x4, offset = 0x4, fixed_abs, tag = 'smem constant byte address 0x4 - core index']
  #allocation1 [shape = 'u32[144,128]{1,0:T(1,128)}', space=vmem, size = 0x12000, scoped, tag = 'internal scratch']
  #allocation2 [shape = 'f32[8,16]{1,0:T(8,128)}', space=vmem, size = 0x1000, scoped, tag = 'scratch operand']
  %s0 = inlined_call_operand.vmem [shape: f32[8,16], index: 0, kind: input, shape index: {}]
  %s1 = inlined_call_operand.vmem [shape: s32[8,1], index: 1, kind: input, shape index: {}]
  %s2 = inlined_call_operand.vmem [shape: f32[8,1], index: 2, kind: output, shape index: {}]
  %s3 = sld [smem:[#allocation0]]
  $region26: #{tpu_custom_call.1} parent=0
    _
  %s5 = ssub.s32 1, %s3
  %s6 = scalar_select 0, %s5, %s3
  // Predicated region
  $region2: #{tpu_custom_call.1} parent=0 // pred_check
    _
  $region3: #{tpu_custom_call.1} parent=0 // pred_check_branch
    %8 = sbr.rel (0) target = $region5
  $region4: #{tpu_custom_call.1} parent=0 // pred_region
    _
  $region5: #{tpu_custom_call.1} parent=0 // pred_fallthru
    _
  // Predicated region
  $region6: #{tpu_custom_call.1} parent=0 // pred_check
    _
  $region7: #{tpu_custom_call.1} parent=0 // pred_check_branch
    %10 = sbr.rel (0) target = $region9
  $region8: #{tpu_custom_call.1} parent=0 // pred_region
    _
  $region9: #{tpu_custom_call.1} parent=0 // pred_fallthru
    _
  %p11 = scmp.eq.s32.totalorder 0, 0
  // Predicated region
  $region10: #{tpu_custom_call.1} parent=0 // pred_check
    %p12 = pneg %p11
  $region11: #{tpu_custom_call.1} parent=0 // pred_check_branch
    %14 = sbr.rel (%p12) target = $region13
  $region12: #{tpu_custom_call.1} parent=0 // pred_region
    %vm15 = vcmask 130048
    %16 = vst.msk [vmem:[#allocation2] sm:$0xff] %vm15, 0.0
  $region13: #{tpu_custom_call.1} parent=0 // pred_fallthru
    _
  %v17 = vld [vmem:[%s0] sm:$0xff]
  %v18 = vld [vmem:[%s1] sm:$0xff]
  %v19 = vlaneseq
  %v20 = vand.u32 %v19, 127
  %s21 = smul.u32 0, 16
  %v22 = vstv %s21
  %v23 = vsub.s32 %v18, %v22
  %24 = vset.pattern.permute.xlu0 0
  %25 = vperm.xlu0 %24, %v23
  %v26 = vpop.permute.xlu0 %25
  %vm27 = vcmp.ne.s32.totalorder %v20, %v26
  %v28 = vmul.f32 %v17, 30.0
  %v29 = vmin.f32 %v28, 80.0
  %v30 = vmul.f32 %v29, 1.442695
  %v31 = vpow.pop %v30
  %v32 = vsel %vm27, %v31, 0.0
  %v33 = vld [vmem:[#allocation2] sm:$0xff]
  %v34 = vadd.f32 %v33, %v32
  %vm35 = vcmask 130048
  %36 = vst.msk [vmem:[#allocation2] sm:$0xff] %vm35, %v34
  // Predicated region
  $region14: #{tpu_custom_call.1} parent=0 // pred_check
    %p37 = pneg %p11
  $region15: #{tpu_custom_call.1} parent=0 // pred_check_branch
    %39 = sbr.rel (%p37) target = $region17
  $region16: #{tpu_custom_call.1} parent=0 // pred_region
    %v40 = vld [vmem:[#allocation2] sm:$0xff]
    %v41 = vsel %vm35, %v40, 0.0
    %42 = vadd.xlane.f32.xlu0 %v41
    %v43 = vpop.xlane.xlu0 %42
    %vm44 = vcmask 7168
    %45 = vst.msk [vmem:[%s2] sm:$0xff] %vm44, %v43
  $region17: #{tpu_custom_call.1} parent=0 // pred_fallthru
    _
  // Predicated region
  $region18: #{tpu_custom_call.1} parent=0 // pred_check
    _
  $region19: #{tpu_custom_call.1} parent=0 // pred_check_branch
    %47 = sbr.rel (0) target = $region21
  $region20: #{tpu_custom_call.1} parent=0 // pred_region
    _
  $region21: #{tpu_custom_call.1} parent=0 // pred_fallthru
    _
  // Predicated region
  $region22: #{tpu_custom_call.1} parent=0 // pred_check
    _
  $region23: #{tpu_custom_call.1} parent=0 // pred_check_branch
    %49 = sbr.rel (0) target = $region25
  $region24: #{tpu_custom_call.1} parent=0 // pred_region
    _
  $region25: #{tpu_custom_call.1} parent=0 // pred_fallthru
    _

</llo_original>
